<compile_context>
chip_gen: v7x
topology: tpu7x:2x2x1
jax: 0.10.0
libtpu: 0.0.40
codegen_flags: <defaults>
</compile_context>

<pallas_src>
import jax
import jax.numpy as jnp
from jax.experimental import pallas as pl
from jax.experimental.pallas import tpu as pltpu


def _identity_dma_kernel(x_hbm_ref, o_hbm_ref, sem):
    # Direct HBM -> HBM copy: one DMA descriptor for the whole array.
    # No VMEM pass, no (8,128) layout constraints, works for any shape/dtype.
    cp = pltpu.make_async_copy(x_hbm_ref, o_hbm_ref, sem)
    cp.start()
    cp.wait()


def _pallas_identity_copy(x):
    """Identity copy of `x` via a single HBM->HBM DMA inside a pallas_call."""
    nbytes = x.size * jnp.dtype(x.dtype).itemsize
    return pl.pallas_call(
        _identity_dma_kernel,
        out_shape=jax.ShapeDtypeStruct(x.shape, x.dtype),
        # Keep both operands in HBM; the kernel body drives the DMA itself.
        in_specs=[pl.BlockSpec(memory_space=pl.ANY)],
        out_specs=pl.BlockSpec(memory_space=pl.ANY),
        scratch_shapes=[pltpu.SemaphoreType.DMA(())],
        # Advisory for XLA's scheduler: zero compute, pure bandwidth.
        cost_estimate=pl.CostEstimate(
            flops=0,
            transcendentals=0,
            bytes_accessed=2 * nbytes,
        ),
    )(x)


class LayerLoggerPallas:
    """JAX/Pallas equivalent of layer_logger(prefix, log_type='size').

    forward(x): prints `prefix x.shape` (when enabled) and returns x.

    use_pallas_copy:
      False -> return x directly (recommended in real networks: the op is an
               identity, so the fastest implementation is no kernel and no
               HBM traffic at all).
      True  -> route x through the Pallas HBM->HBM DMA identity kernel
               (used here so the kernel path is compiled and exercised).
    """

    def __init__(self, prefix, log_type="size", if_print=True,
                 use_pallas_copy=True):
        self.prefix = prefix
        self.log_type = log_type
        self.if_print = if_print
        self.use_pallas_copy = use_pallas_copy

    def __call__(self, x):
        # Side effect of the PyTorch module: log(prefix, x.size()).
        # (Under jax.jit this fires at trace time; shapes are static.)
        # TODO(synk): per-execution (not per-trace) logging would need
        # jax.debug.print / io_callback; the colored-terminal formatting of
        # the original logger has no device-side equivalent.
        if self.log_type == "size" and self.if_print:
            print(self.prefix, tuple(x.shape))

        if not self.use_pallas_copy:
            return x

        # Degenerate shapes: nothing to DMA — identity is exact either way.
        if x.size == 0 or x.ndim == 0:
            return x

        return _pallas_identity_copy(x)


if __name__ == "__main__":
    key = jax.random.PRNGKey(0)

    layer = LayerLoggerPallas(prefix="feature_map:", log_type="size",
                              use_pallas_copy=True)

    # Small NCHW tensor consistent with a conv-net feature map.
    x = jax.random.normal(key, (2, 4, 16, 16), dtype=jnp.float32)
    y = jax.block_until_ready(layer(x))
    assert y.shape == x.shape
    assert y.dtype == x.dtype
    assert bool(jnp.array_equal(y, x))

    # Native sub-32-bit dtype (no bitcast packing anymore).
    xb = jax.random.normal(key, (2, 4, 16, 16), dtype=jnp.bfloat16)
    yb = jax.block_until_ready(layer(xb))
    assert yb.shape == xb.shape
    assert yb.dtype == xb.dtype
    assert bool(jnp.array_equal(yb, xb))

    # Odd element count (not a multiple of 128): previously the robustness
    # hazard, now just another byte copy.
    xo = jax.random.normal(key, (3, 5, 7), dtype=jnp.float32)
    yo = jax.block_until_ready(layer(xo))
    assert yo.shape == xo.shape
    assert bool(jnp.array_equal(yo, xo))

    print("KERNEL_OK")
</pallas_src>

<mosaic_0001>
module attributes {stable_mosaic.version = 11 : i64} {
  func.func @_identity_dma_kernel(%arg0: memref<2x4x16x16xf32, #tpu.memory_space<any>>, %arg1: memref<2x4x16x16xf32, #tpu.memory_space<any>>, %arg2: memref<!tpu.dma_semaphore, #tpu.memory_space<semaphore_mem>>) attributes {dimension_semantics = [], scalar_prefetch = 0 : i64, scratch_operands = 1 : i64, tpu.core_type = #tpu.core_type<tc>} {
    tpu.enqueue_dma source(%arg0 : memref<2x4x16x16xf32, #tpu.memory_space<any>>) target(%arg1 : memref<2x4x16x16xf32, #tpu.memory_space<any>>) target_semaphore(%arg2 : memref<!tpu.dma_semaphore, #tpu.memory_space<semaphore_mem>>)
    tpu.wait_dma2 semaphore(%arg2 : memref<!tpu.dma_semaphore, #tpu.memory_space<semaphore_mem>>) src(%arg0 : memref<2x4x16x16xf32, #tpu.memory_space<any>>) dst(%arg1 : memref<2x4x16x16xf32, #tpu.memory_space<any>>)
    return
  }
}

</mosaic_0001>

<llo_original>
// kernel: tpu_custom_call.1
$region0: #{tpu_custom_call.1}
  #allocation0 [shape = 'u32[]', space=smem, size = 0x4, offset = 0x4, fixed_abs, tag = 'smem constant byte address 0x4 - core index']
  #allocation1 [shape = 'u32[144,128]{1,0:T(1,128)}', space=vmem, size = 0x12000, scoped, tag = 'internal scratch']
  #allocation2 [shape = 's32[1]{0}', space=sflag, size = 0x4, scoped, tag = 'scratch operand']
  #allocation3 [shape = 's32[]', space=sflag, size = 0x4, offset = 0, fixed_abs, tag = 'sflag constant byte address 0x0 - dummy sync flag']
  #allocation4 [shape = 'u32[0]{0}', space=smem, size = 0, offset = 0, fixed_abs, tag = 'smem constant byte address 0x0 - null']
  %s0 = inlined_call_operand.hbm [shape: f32[2,4,16,16], index: 0, kind: input, shape index: {}]
  %s1 = inlined_call_operand.hbm [shape: f32[2,4,16,16], index: 1, kind: output, shape index: {}]
  %s2 = sld [smem:[#allocation0]]
  $region2: #{tpu_custom_call.1} parent=0
    _
  %s4 = ssub.s32 1, %s2
  %s5 = scalar_select 0, %s4, %s2
  %s7 = sshll.u32 1, 14
  %s8 = sxor.u32 4294967295, %s7
  %s11 = sshll.u32 3, 24
  %s12 = sxor.u32 4294967295, %s11
  %s13 = sand.u32 0, %s12
  %s15 = sor.u32 %s13, 0
  %18 = dma.general %s0, 2048, %s1, [#allocation2], [#allocation3], [#allocation4], %s15, 0
  %s19 = smul.u32 2, 4
  %s20 = smul.u32 %s19, 16
  %s21 = smul.u32 %s20, 1
  %s22 = sshll.u32 %s21, 4
  %23 = dma.done [#allocation2], %s22
  %24 = vsyncmov [#allocation2]
  %s25 = vpop.sfrf %24
  %p26 = scmp.eq.s32.totalorder %s25, 0
  %p27 = pneg %p26
  %29 = shalt.err (%p27)

</llo_original>
